<compile_context>
chip_gen: v6e
topology: v6e:2x2x1
jax: 0.10.0
libtpu: 0.0.40
codegen_flags: <defaults>
</compile_context>

<pallas_src>
import jax
import jax.numpy as jnp
from jax.experimental import pallas as pl
from jax.experimental.pallas import tpu as pltpu


# ----------------------------- Pallas kernel -------------------------------

def _iaff_kernel(x_ref, r_ref, w1t_ref, b1_ref, w2t_ref, xgb_ref, o_ref):
    # Block shapes:
    #   x_ref, r_ref, o_ref : (1, C, S_tile)   bf16
    #   w1t_ref             : (IC, C)          bf16
    #   b1_ref              : (IC, 1)          f32
    #   w2t_ref             : (C, IC)          bf16
    #   xgb_ref             : (1, C, 1)        f32   (global-branch output + local b2)
    xa = x_ref[0] + r_ref[0]                                          # (C, S) bf16

    # local attention: conv1x1+BN -> ReLU -> conv1x1+BN (BN folded, bias split out)
    h = jnp.dot(w1t_ref[...], xa, preferred_element_type=jnp.float32) + b1_ref[...]
    h = jnp.maximum(h, 0.0).astype(jnp.bfloat16)                      # (IC, S)
    xl = jnp.dot(w2t_ref[...], h, preferred_element_type=jnp.float32)  # (C, S)

    # fuse: xgb = xg (hoisted global branch) + b2 (local branch's final bias)
    wei = jax.nn.sigmoid(xl + xgb_ref[0])                             # (C, S) f32

    # xi = x*wei + res*(1-wei) == res + wei*(x - res); cast only in this expression.
    x_f = x_ref[0].astype(jnp.float32)
    r_f = r_ref[0].astype(jnp.float32)
    o_ref[0] = (r_f + wei * (x_f - r_f)).astype(o_ref.dtype)


# ------------------------------ tiling policy --------------------------------

def _default_max_tile():
    """Generation-aware S-tile ceiling (lanes)."""
    try:
        kind = jax.devices()[0].device_kind.lower()
    except Exception:
        return 8192
    if "v5" in kind or "v4" in kind:
        return 8192            # small default scoped VMEM; 8192 lanes already ~2us DMA/step
    return 16384               # v6e / v7x: 1.4-3.2 TB/s HBM needs bigger steps


def _choose_s_tile(S, max_tile):
    """Return (s_tile, S_padded).

    Guarantees s_tile == S_padded (full extent) or s_tile % 128 == 0, so the
    BlockSpec (8,128) divisibility rule is always satisfied.
    """
    if S <= max_tile:
        return S, S
    # Pad S up to a multiple of 512, then pick the largest multiple-of-512 tile
    # <= max_tile that divides the padded extent (tile=512 always works).
    s_pad = ((S + 511) // 512) * 512
    tile = (max_tile // 512) * 512
    while tile > 512 and s_pad % tile != 0:
        tile -= 512
    return tile, s_pad


# ------------------------------ wrapper --------------------------------------

def iaff_pallas(x_ncs, res_ncs, params, *, s_tile=None, vmem_limit_bytes=48 << 20):
    """x_ncs, res_ncs: (N, C, S) bfloat16. params: folded conv+BN weights (f32)."""
    N, C, S = x_ncs.shape
    IC = params["w1"].shape[1]

    # ---- hoisted global-attention branch (trivial flops, plain JAX) ----------
    # Keep HBM reads in bf16; accumulate the reduction in f32 (no f32 temporaries).
    xa_mean = (jnp.mean(x_ncs, axis=2, dtype=jnp.float32)
               + jnp.mean(res_ncs, axis=2, dtype=jnp.float32))        # (N, C)
    g = jnp.maximum(xa_mean @ params["w3"] + params["b3"], 0.0)       # (N, IC)
    xg = g @ params["w4"] + params["b4"]                              # (N, C)
    # fold the local branch's final bias b2 into xg -> one small per-batch vector
    xgb = (xg + params["b2"])[:, :, None].astype(jnp.float32)         # (N, C, 1)

    # ---- tile selection -------------------------------------------------------
    if s_tile is None:
        s_tile, S_pad = _choose_s_tile(S, _default_max_tile())
    else:
        assert s_tile == S or s_tile % 128 == 0, "s_tile must equal S or be a multiple of 128"
        S_pad = ((S + s_tile - 1) // s_tile) * s_tile
    # Give v7x's two TensorCores enough grid steps to split on larger problems.
    while N * (S_pad // s_tile) < 4 and s_tile % 256 == 0 and s_tile >= 1024:
        s_tile //= 2
    n_s = S_pad // s_tile

    if S_pad != S:
        pad = [(0, 0), (0, 0), (0, S_pad - S)]
        x_in = jnp.pad(x_ncs, pad)
        r_in = jnp.pad(res_ncs, pad)
    else:
        x_in, r_in = x_ncs, res_ncs

    # transposed weights for the channels-on-sublane layout
    w1t = params["w1"].T.astype(jnp.bfloat16)                         # (IC, C)
    b1 = params["b1"].T.astype(jnp.float32)                           # (IC, 1)
    w2t = params["w2"].T.astype(jnp.bfloat16)                         # (C, IC)

    data_spec = pl.BlockSpec((1, C, s_tile), lambda n, s: (n, 0, s))

    def const_spec(shape):
        return pl.BlockSpec(shape, lambda n, s: (0,) * len(shape))

    out = pl.pallas_call(
        _iaff_kernel,
        out_shape=jax.ShapeDtypeStruct((N, C, S_pad), jnp.bfloat16),
        grid=(N, n_s),
        in_specs=[
            data_spec,                                        # x
            data_spec,                                        # residual
            const_spec((IC, C)),                              # w1^T
            const_spec((IC, 1)),                              # b1
            const_spec((C, IC)),                              # w2^T
            pl.BlockSpec((1, C, 1), lambda n, s: (n, 0, 0)),  # xg + b2 (per batch)
        ],
        out_specs=data_spec,
        compiler_params=pltpu.CompilerParams(
            dimension_semantics=("parallel", "parallel"),
            vmem_limit_bytes=vmem_limit_bytes),
    )(x_in, r_in, w1t, b1, w2t, xgb)

    return out[:, :, :S] if S_pad != S else out


# ------------------------- parameter construction --------------------------

def _fold_conv_bn(key, c_in, c_out, eps=1e-5):
    """Deterministic pointwise Conv3d + BatchNorm3d (eval mode), folded.

    Returns W_eff (c_in, c_out), b_eff (1, c_out) s.t. y = x @ W_eff + b_eff.
    """
    k1, k2, k3, k4, k5, k6 = jax.random.split(key, 6)
    w = jax.random.normal(k1, (c_in, c_out), jnp.float32) * 0.1
    b = jax.random.normal(k2, (c_out,), jnp.float32) * 0.1
    gamma = 1.0 + 0.1 * jax.random.normal(k3, (c_out,), jnp.float32)
    beta = 0.1 * jax.random.normal(k4, (c_out,), jnp.float32)
    mean = 0.1 * jax.random.normal(k5, (c_out,), jnp.float32)
    var = 0.5 + jax.random.uniform(k6, (c_out,), jnp.float32)  # > 0
    scale = gamma / jnp.sqrt(var + eps)
    w_eff = w * scale[None, :]
    b_eff = (b - mean) * scale + beta
    return w_eff, b_eff[None, :]


def make_params(key, channels=33, r=4):
    ic = channels // r
    keys = jax.random.split(key, 4)
    w1, b1 = _fold_conv_bn(keys[0], channels, ic)   # local_att conv1+bn1
    w2, b2 = _fold_conv_bn(keys[1], ic, channels)   # local_att conv2+bn2
    w3, b3 = _fold_conv_bn(keys[2], channels, ic)   # global_att conv1+bn1
    w4, b4 = _fold_conv_bn(keys[3], ic, channels)   # global_att conv2+bn2
    return dict(w1=w1, b1=b1, w2=w2, b2=b2, w3=w3, b3=b3, w4=w4, b4=b4)


# ------------------------------ reference ----------------------------------

def iaff_reference(x_ncs, res_ncs, p):
    """Pure-JAX f32 reference in (N, C, S) layout."""
    xa = x_ncs + res_ncs
    xa_t = jnp.swapaxes(xa, 1, 2)                          # (N, S, C)
    h = jnp.maximum(xa_t @ p["w1"] + p["b1"], 0.0)
    xl = h @ p["w2"] + p["b2"]                             # (N, S, C)
    pooled = jnp.mean(xa_t, axis=1, keepdims=True)         # (N, 1, C)
    g = jnp.maximum(pooled @ p["w3"] + p["b3"], 0.0)
    xg = g @ p["w4"] + p["b4"]                             # (N, 1, C)
    wei = jax.nn.sigmoid(xl + xg)
    out = jnp.swapaxes(x_ncs, 1, 2) * wei + jnp.swapaxes(res_ncs, 1, 2) * (1.0 - wei)
    return jnp.swapaxes(out, 1, 2)                         # (N, C, S)


# --------------------------------- main -------------------------------------

if __name__ == "__main__":
    key = jax.random.PRNGKey(0)
    k_x, k_r, k_p = jax.random.split(key, 3)

    # Module defaults: channels=33, r=4 -> inter_channels=8. Small spatial grid.
    N, C, D, H, W = 2, 33, 4, 4, 4
    S = D * H * W
    x_ncdhw = jax.random.normal(k_x, (N, C, D, H, W), jnp.float32)
    res_ncdhw = jax.random.normal(k_r, (N, C, D, H, W), jnp.float32)

    params = make_params(k_p, channels=C, r=4)

    # NCDHW -> (N, C, S): channels on sublanes, flattened spatial on lanes.
    x_ncs = x_ncdhw.reshape(N, C, S).astype(jnp.bfloat16)
    res_ncs = res_ncdhw.reshape(N, C, S).astype(jnp.bfloat16)

    out = iaff_pallas(x_ncs, res_ncs, params)
    out = jax.block_until_ready(out)

    # Reference uses the same (bf16-rounded) inputs, upcast to f32.
    ref = iaff_reference(x_ncs.astype(jnp.float32), res_ncs.astype(jnp.float32), params)
    assert jnp.allclose(out.astype(jnp.float32), ref, atol=5e-2, rtol=5e-2), \
        "mismatch vs JAX reference"

    # Back to original NCDHW layout (the fused xi tensor).
    out_ncdhw = out.reshape(N, C, D, H, W)
    jax.block_until_ready(out_ncdhw)

    # TODO(synk): local_att2 / global_att2 are constructed in __init__ but never
    # used by the reference forward(), which also has no return; we return xi.
    print("KERNEL_OK")
</pallas_src>

<mosaic_0001>
module attributes {stable_mosaic.version = 11 : i64} {
  func.func @_iaff_kernel(%arg0: i32, %arg1: i32, %arg2: memref<1x33x64xbf16, #tpu.memory_space<vmem>>, %arg3: memref<1x33x64xbf16, #tpu.memory_space<vmem>>, %arg4: memref<8x33xbf16, #tpu.memory_space<vmem>>, %arg5: memref<8x1xf32, #tpu.memory_space<vmem>>, %arg6: memref<33x8xbf16, #tpu.memory_space<vmem>>, %arg7: memref<1x33x1xf32, #tpu.memory_space<vmem>>, %arg8: memref<1x33x64xbf16, #tpu.memory_space<vmem>>) attributes {dimension_semantics = [#tpu.dimension_semantics<parallel>, #tpu.dimension_semantics<parallel>], iteration_bounds = array<i64: 2, 1>, scalar_prefetch = 0 : i64, scratch_operands = 0 : i64, tpu.core_type = #tpu.core_type<tc>, window_params = [{transform_indices = @transform_0, window_bounds = array<i64: 1, 33, 64>}, {transform_indices = @transform_1, window_bounds = array<i64: 1, 33, 64>}, {pipeline_mode = #tpu.pipeline_mode<synchronous>, transform_indices = @transform_2, window_bounds = array<i64: 8, 33>}, {pipeline_mode = #tpu.pipeline_mode<synchronous>, transform_indices = @transform_3, window_bounds = array<i64: 8, 1>}, {pipeline_mode = #tpu.pipeline_mode<synchronous>, transform_indices = @transform_4, window_bounds = array<i64: 33, 8>}, {transform_indices = @transform_5, window_bounds = array<i64: 1, 33, 1>}, {transform_indices = @transform_6, window_bounds = array<i64: 1, 33, 64>}]} {
    %c0 = arith.constant 0 : index
    %c0_0 = arith.constant 0 : index
    %c0_1 = arith.constant 0 : index
    %0 = vector.load %arg2[%c0, %c0_0, %c0_1] : memref<1x33x64xbf16, #tpu.memory_space<vmem>>, vector<1x33x64xbf16>
    %1 = vector.shape_cast %0 : vector<1x33x64xbf16> to vector<33x64xbf16>
    %c0_2 = arith.constant 0 : index
    %c0_3 = arith.constant 0 : index
    %c0_4 = arith.constant 0 : index
    %2 = vector.load %arg3[%c0_2, %c0_3, %c0_4] : memref<1x33x64xbf16, #tpu.memory_space<vmem>>, vector<1x33x64xbf16>
    %3 = vector.shape_cast %2 : vector<1x33x64xbf16> to vector<33x64xbf16>
    %4 = arith.addf %1, %3 : vector<33x64xbf16>
    %c0_5 = arith.constant 0 : index
    %c0_6 = arith.constant 0 : index
    %5 = vector.load %arg4[%c0_5, %c0_6] : memref<8x33xbf16, #tpu.memory_space<vmem>>, vector<8x33xbf16>
    %cst = arith.constant dense<0.000000e+00> : vector<8x64xf32>
    %6 = tpu.matmul %5, %4, %cst {dimension_numbers = #tpu.dot_dimension_numbers<[1], [0], [0], [1], [0, 0, 1, 1], [], []>} : vector<8x33xbf16>, vector<33x64xbf16>, vector<8x64xf32> -> vector<8x64xf32>
    %c0_7 = arith.constant 0 : index
    %c0_8 = arith.constant 0 : index
    %7 = vector.load %arg5[%c0_7, %c0_8] : memref<8x1xf32, #tpu.memory_space<vmem>>, vector<8x1xf32>
    %8 = vector.broadcast %7 : vector<8x1xf32> to vector<8x64xf32>
    %9 = arith.addf %6, %8 : vector<8x64xf32>
    %cst_9 = arith.constant 0.000000e+00 : f32
    %10 = vector.broadcast %cst_9 : f32 to vector<8x64xf32>
    %11 = arith.maximumf %9, %10 : vector<8x64xf32>
    %12 = arith.truncf %11 : vector<8x64xf32> to vector<8x64xbf16>
    %c0_10 = arith.constant 0 : index
    %c0_11 = arith.constant 0 : index
    %13 = vector.load %arg6[%c0_10, %c0_11] : memref<33x8xbf16, #tpu.memory_space<vmem>>, vector<33x8xbf16>
    %cst_12 = arith.constant dense<0.000000e+00> : vector<33x64xf32>
    %14 = tpu.matmul %13, %12, %cst_12 {dimension_numbers = #tpu.dot_dimension_numbers<[1], [0], [0], [1], [0, 0, 1, 1], [], []>} : vector<33x8xbf16>, vector<8x64xbf16>, vector<33x64xf32> -> vector<33x64xf32>
    %c0_13 = arith.constant 0 : index
    %c0_14 = arith.constant 0 : index
    %c0_15 = arith.constant 0 : index
    %15 = vector.load %arg7[%c0_13, %c0_14, %c0_15] : memref<1x33x1xf32, #tpu.memory_space<vmem>>, vector<1x33x1xf32>
    %16 = vector.shape_cast %15 : vector<1x33x1xf32> to vector<33x1xf32>
    %17 = vector.broadcast %16 : vector<33x1xf32> to vector<33x64xf32>
    %18 = arith.addf %14, %17 : vector<33x64xf32>
    %19 = arith.negf %18 : vector<33x64xf32>
    %20 = math.exp %19 : vector<33x64xf32>
    %cst_16 = arith.constant 1.000000e+00 : f32
    %21 = vector.broadcast %cst_16 : f32 to vector<33x64xf32>
    %22 = arith.addf %21, %20 : vector<33x64xf32>
    %23 = arith.divf %21, %22 : vector<33x64xf32>
    %c0_17 = arith.constant 0 : index
    %c0_18 = arith.constant 0 : index
    %c0_19 = arith.constant 0 : index
    %24 = vector.load %arg2[%c0_17, %c0_18, %c0_19] : memref<1x33x64xbf16, #tpu.memory_space<vmem>>, vector<1x33x64xbf16>
    %25 = vector.shape_cast %24 : vector<1x33x64xbf16> to vector<33x64xbf16>
    %26 = arith.extf %25 : vector<33x64xbf16> to vector<33x64xf32>
    %c0_20 = arith.constant 0 : index
    %c0_21 = arith.constant 0 : index
    %c0_22 = arith.constant 0 : index
    %27 = vector.load %arg3[%c0_20, %c0_21, %c0_22] : memref<1x33x64xbf16, #tpu.memory_space<vmem>>, vector<1x33x64xbf16>
    %28 = vector.shape_cast %27 : vector<1x33x64xbf16> to vector<33x64xbf16>
    %29 = arith.extf %28 : vector<33x64xbf16> to vector<33x64xf32>
    %30 = arith.subf %26, %29 : vector<33x64xf32>
    %31 = arith.mulf %23, %30 : vector<33x64xf32>
    %32 = arith.addf %29, %31 : vector<33x64xf32>
    %33 = arith.truncf %32 : vector<33x64xf32> to vector<33x64xbf16>
    %c0_23 = arith.constant 0 : index
    %c0_24 = arith.constant 0 : index
    %c0_25 = arith.constant 0 : index
    %34 = vector.load %arg8[%c0_23, %c0_24, %c0_25] : memref<1x33x64xbf16, #tpu.memory_space<vmem>>, vector<1x33x64xbf16>
    %35 = vector.shape_cast %34 : vector<1x33x64xbf16> to vector<33x64xbf16>
    %36 = vector.shape_cast %33 : vector<33x64xbf16> to vector<1x33x64xbf16>
    tpu.vector_store %arg8[%c0_23, %c0_24, %c0_25], %36 {strides = array<i32>} : memref<1x33x64xbf16, #tpu.memory_space<vmem>>, vector<1x33x64xbf16>,
    return
  }
  func.func @transform_0(%arg0: i32, %arg1: i32) -> (i32, i32, i32) {
    %c0_i32 = arith.constant 0 : i32
    %c0_i32_0 = arith.constant 0 : i32
    return %arg0, %c0_i32, %arg1 : i32, i32, i32
  }
  func.func @transform_1(%arg0: i32, %arg1: i32) -> (i32, i32, i32) {
    %c0_i32 = arith.constant 0 : i32
    %c0_i32_0 = arith.constant 0 : i32
    return %arg0, %c0_i32, %arg1 : i32, i32, i32
  }
  func.func @transform_2(%arg0: i32, %arg1: i32) -> (i32, i32) {
    %c0_i32 = arith.constant 0 : i32
    %c0_i32_0 = arith.constant 0 : i32
    %c0_i32_1 = arith.constant 0 : i32
    return %c0_i32, %c0_i32_0 : i32, i32
  }
  func.func @transform_3(%arg0: i32, %arg1: i32) -> (i32, i32) {
    %c0_i32 = arith.constant 0 : i32
    %c0_i32_0 = arith.constant 0 : i32
    %c0_i32_1 = arith.constant 0 : i32
    return %c0_i32, %c0_i32_0 : i32, i32
  }
  func.func @transform_4(%arg0: i32, %arg1: i32) -> (i32, i32) {
    %c0_i32 = arith.constant 0 : i32
    %c0_i32_0 = arith.constant 0 : i32
    %c0_i32_1 = arith.constant 0 : i32
    return %c0_i32, %c0_i32_0 : i32, i32
  }
  func.func @transform_5(%arg0: i32, %arg1: i32) -> (i32, i32, i32) {
    %c0_i32 = arith.constant 0 : i32
    %c0_i32_0 = arith.constant 0 : i32
    %c0_i32_1 = arith.constant 0 : i32
    return %arg0, %c0_i32, %c0_i32_0 : i32, i32, i32
  }
  func.func @transform_6(%arg0: i32, %arg1: i32) -> (i32, i32, i32) {
    %c0_i32 = arith.constant 0 : i32
    %c0_i32_0 = arith.constant 0 : i32
    return %arg0, %c0_i32, %arg1 : i32, i32, i32
  }
}

</mosaic_0001>

<llo_original>
// kernel: tpu_custom_call.1
$region0: #{tpu_custom_call.1}
  #allocation0 [shape = 'u32[]', space=smem, size = 0x4, offset = 0x4, fixed_abs, tag = 'smem constant byte address 0x4 - core index']
  #allocation1 [shape = 'u32[144,128]{1,0:T(1,128)}', space=vmem, size = 0x12000, scoped, tag = 'internal scratch']
  %s0 = inlined_call_operand.vmem [shape: bf16[2,33,64], index: 0, kind: input, shape index: {}]
  %s1 = inlined_call_operand.vmem [shape: bf16[2,33,64], index: 1, kind: input, shape index: {}]
  %s2 = inlined_call_operand.vmem [shape: bf16[8,33], index: 2, kind: input, shape index: {}]
  %s3 = inlined_call_operand.vmem [shape: f32[8,1], index: 3, kind: input, shape index: {}]
  %s4 = inlined_call_operand.vmem [shape: bf16[33,8], index: 4, kind: input, shape index: {}]
  %s5 = inlined_call_operand.vmem [shape: f32[2,33,1], index: 5, kind: input, shape index: {}]
  %s6 = inlined_call_operand.vmem [shape: bf16[2,33,64], index: 6, kind: output, shape index: {}]
  %s7 = sld [smem:[#allocation0]]
  $region57: #{tpu_custom_call.1} parent=0
    _
  %s9 = ssub.s32 1, %s7
  %s10 = scalar_select 0, %s9, %s7
  loop: start=0, step=1, limit=4
  $region2: #{tpu_custom_call.1} parent=0 // loop_pre_header
    _
  $region3: #{tpu_custom_call.1} parent=0 // loop_header
    %s12 = sphi 0, %s16
    %p13 = scmp.ge.s32.totalorder %s12, 4
    %s19 = sphi 0, %s31
    %s20 = sphi 0, %s27
    %s21 = sphi 0, %s19
    %s22 = sphi 0, %s20
    %s23 = sphi 0, %s21
    %s24 = sphi 0, %s22
    %s36 = sphi 0, %s38
    %s39 = sphi 0, %s36
    %s40 = sphi 0, %s39
    %s56 = sphi 0, %s40
    %s64 = sphi 0, %s66
    %s67 = sphi 0, %s64
    %s68 = sphi 0, %s67
    %s84 = sphi 0, %s68
    %s88 = sphi 0, %s88
    %s90 = sphi 0, %s88
    %s91 = sphi 0, %s90
    %s105 = sphi 0, %s91
    %s109 = sphi 0, %s109
    %s111 = sphi 0, %s109
    %s112 = sphi 0, %s111
    %s126 = sphi 0, %s112
    %s130 = sphi 0, %s130
    %s132 = sphi 0, %s130
    %s133 = sphi 0, %s132
    %s147 = sphi 0, %s133
    %s153 = sphi 0, %s155
    %s156 = sphi 0, %s153
    %s157 = sphi 0, %s156
    %s173 = sphi 0, %s157
    %s181 = sphi 0, %s183
    %s184 = sphi 0, %s181
    %s185 = sphi 0, %s184
    %s201 = sphi 0, %s185
  $region4: #{tpu_custom_call.1} parent=0 // loop_header_branch
    %15 = sbr.rel (%p13) target = $region8
  $region5: #{tpu_custom_call.1} parent=0 // loop_body
    %s17 = ssub.s32 %s12, 1
    %s18 = ssub.s32 %s12, 2
    %s25 = sadd.s32 1, %s20
    %p26 = scmp.ge.s32.totalorder %s25, 1
    %s27 = scalar_select %p26, 0, %s25
    %s28 = sadd.s32 1, %s19
    %s29 = scalar_select %p26, %s28, %s19
    %p30 = scmp.ge.s32.totalorder %s29, 2
    %s31 = scalar_select %p30, 0, %s29
    %s32 = ssub.s32 %s19, %s31
    %s33 = ssub.s32 %s20, %s27
    %s34 = sor.u32 %s32, %s33
    %p35 = scmp.eq.s32.totalorder %s34, 0
    %s37 = sadd.s32 %s36, 1
    %s38 = scalar_select %p35, %s36, %s37
    %p41 = pneg %p35
    %p42 = scmp.eq.s32.totalorder %s12, 1
    %p43 = por %p41, %p42
    %p44 = scmp.ne.s32.totalorder %s36, %s39
    %p45 = scmp.eq.s32.totalorder %s12, 0
    %p46 = por %p44, %p45
    %p47 = scmp.ne.s32.totalorder %s36, %s39
    %p48 = scmp.eq.s32.totalorder %s17, 1
    %p49 = por %p47, %p48
    %p50 = scmp.ne.s32.totalorder %s39, %s40
    %p51 = scmp.eq.s32.totalorder %s17, 0
    %p52 = por %p50, %p51
    %p53 = scmp.ne.s32.totalorder %s39, %s40
    %p54 = scmp.eq.s32.totalorder %s18, 1
    %p55 = por %p53, %p54
    %p57 = scmp.ne.s32.totalorder %s40, %s56
    %p58 = scmp.eq.s32.totalorder %s18, 0
    %p59 = por %p57, %p58
    %s60 = ssub.s32 %s19, %s31
    %s61 = ssub.s32 %s20, %s27
    %s62 = sor.u32 %s60, %s61
    %p63 = scmp.eq.s32.totalorder %s62, 0
    %s65 = sadd.s32 %s64, 1
    %s66 = scalar_select %p63, %s64, %s65
    %p69 = pneg %p63
    %p70 = scmp.eq.s32.totalorder %s12, 1
    %p71 = por %p69, %p70
    %p72 = scmp.ne.s32.totalorder %s64, %s67
    %p73 = scmp.eq.s32.totalorder %s12, 0
    %p74 = por %p72, %p73
    %p75 = scmp.ne.s32.totalorder %s64, %s67
    %p76 = scmp.eq.s32.totalorder %s17, 1
    %p77 = por %p75, %p76
    %p78 = scmp.ne.s32.totalorder %s67, %s68
    %p79 = scmp.eq.s32.totalorder %s17, 0
    %p80 = por %p78, %p79
    %p81 = scmp.ne.s32.totalorder %s67, %s68
    %p82 = scmp.eq.s32.totalorder %s18, 1
    %p83 = por %p81, %p82
    %p85 = scmp.ne.s32.totalorder %s68, %s84
    %p86 = scmp.eq.s32.totalorder %s18, 0
    %p87 = por %p85, %p86
    %s89 = sadd.s32 %s88, 1
    %p92 = scmp.eq.s32.totalorder %s12, 1
    %p93 = scmp.ne.s32.totalorder %s88, %s90
    %p94 = scmp.eq.s32.totalorder %s12, 0
    %p95 = por %p93, %p94
    %p96 = scmp.ne.s32.totalorder %s88, %s90
    %p97 = scmp.eq.s32.totalorder %s17, 1
    %p98 = por %p96, %p97
    %p99 = scmp.ne.s32.totalorder %s90, %s91
    %p100 = scmp.eq.s32.totalorder %s17, 0
    %p101 = por %p99, %p100
    %p102 = scmp.ne.s32.totalorder %s90, %s91
    %p103 = scmp.eq.s32.totalorder %s18, 1
    %p104 = por %p102, %p103
    %p106 = scmp.ne.s32.totalorder %s91, %s105
    %p107 = scmp.eq.s32.totalorder %s18, 0
    %p108 = por %p106, %p107
    %s110 = sadd.s32 %s109, 1
    %p113 = scmp.eq.s32.totalorder %s12, 1
    %p114 = scmp.ne.s32.totalorder %s109, %s111
    %p115 = scmp.eq.s32.totalorder %s12, 0
    %p116 = por %p114, %p115
    %p117 = scmp.ne.s32.totalorder %s109, %s111
    %p118 = scmp.eq.s32.totalorder %s17, 1
    %p119 = por %p117, %p118
    %p120 = scmp.ne.s32.totalorder %s111, %s112
    %p121 = scmp.eq.s32.totalorder %s17, 0
    %p122 = por %p120, %p121
    %p123 = scmp.ne.s32.totalorder %s111, %s112
    %p124 = scmp.eq.s32.totalorder %s18, 1
    %p125 = por %p123, %p124
    %p127 = scmp.ne.s32.totalorder %s112, %s126
    %p128 = scmp.eq.s32.totalorder %s18, 0
    %p129 = por %p127, %p128
    %s131 = sadd.s32 %s130, 1
    %p134 = scmp.eq.s32.totalorder %s12, 1
    %p135 = scmp.ne.s32.totalorder %s130, %s132
    %p136 = scmp.eq.s32.totalorder %s12, 0
    %p137 = por %p135, %p136
    %p138 = scmp.ne.s32.totalorder %s130, %s132
    %p139 = scmp.eq.s32.totalorder %s17, 1
    %p140 = por %p138, %p139
    %p141 = scmp.ne.s32.totalorder %s132, %s133
    %p142 = scmp.eq.s32.totalorder %s17, 0
    %p143 = por %p141, %p142
    %p144 = scmp.ne.s32.totalorder %s132, %s133
    %p145 = scmp.eq.s32.totalorder %s18, 1
    %p146 = por %p144, %p145
    %p148 = scmp.ne.s32.totalorder %s133, %s147
    %p149 = scmp.eq.s32.totalorder %s18, 0
    %p150 = por %p148, %p149
    %s151 = ssub.s32 %s19, %s31
    %p152 = scmp.eq.s32.totalorder %s151, 0
    %s154 = sadd.s32 %s153, 1
    %s155 = scalar_select %p152, %s153, %s154
    %p158 = pneg %p152
    %p159 = scmp.eq.s32.totalorder %s12, 1
    %p160 = por %p158, %p159
    %p161 = scmp.ne.s32.totalorder %s153, %s156
    %p162 = scmp.eq.s32.totalorder %s12, 0
    %p163 = por %p161, %p162
    %p164 = scmp.ne.s32.totalorder %s153, %s156
    %p165 = scmp.eq.s32.totalorder %s17, 1
    %p166 = por %p164, %p165
    %p167 = scmp.ne.s32.totalorder %s156, %s157
    %p168 = scmp.eq.s32.totalorder %s17, 0
    %p169 = por %p167, %p168
    %p170 = scmp.ne.s32.totalorder %s156, %s157
    %p171 = scmp.eq.s32.totalorder %s18, 1
    %p172 = por %p170, %p171
    %p174 = scmp.ne.s32.totalorder %s157, %s173
    %p175 = scmp.eq.s32.totalorder %s18, 0
    %p176 = por %p174, %p175
    %s177 = ssub.s32 %s19, %s31
    %s178 = ssub.s32 %s20, %s27
    %s179 = sor.u32 %s177, %s178
    %p180 = scmp.eq.s32.totalorder %s179, 0
    %s182 = sadd.s32 %s181, 1
    %s183 = scalar_select %p180, %s181, %s182
    %p186 = pneg %p180
    %p187 = scmp.eq.s32.totalorder %s12, 1
    %p188 = por %p186, %p187
    %p189 = scmp.ne.s32.totalorder %s181, %s184
    %p190 = scmp.eq.s32.totalorder %s12, 0
    %p191 = por %p189, %p190
    %p192 = scmp.ne.s32.totalorder %s181, %s184
    %p193 = scmp.eq.s32.totalorder %s17, 1
    %p194 = por %p192, %p193
    %p195 = scmp.ne.s32.totalorder %s184, %s185
    %p196 = scmp.eq.s32.totalorder %s17, 0
    %p197 = por %p195, %p196
    %p198 = scmp.ne.s32.totalorder %s184, %s185
    %p199 = scmp.eq.s32.totalorder %s18, 1
    %p200 = por %p198, %p199
    %p202 = scmp.ne.s32.totalorder %s185, %s201
    %p203 = scmp.eq.s32.totalorder %s18, 0
    %p204 = por %p202, %p203
    %p205 = scmp.le.s32.totalorder 1, %s12
    %p206 = scmp.lt.s32.totalorder %s12, 3
    %p207 = pnand %p205, %p206
    %p208 = pneg %p207
    // Predicated region
    $region9: #{tpu_custom_call.1} parent=5 // pred_check
      _
    $region10: #{tpu_custom_call.1} parent=5 // pred_check_branch
      %210 = sbr.rel (%p207) target = $region12
    $region11: #{tpu_custom_call.1} parent=5 // pred_region
      %s211 = ssub.s32 %s12, 1
      // Predicated region
      $region13: #{tpu_custom_call.1} parent=11 // pred_check
        %p212 = pneg %p101
      $region14: #{tpu_custom_call.1} parent=11 // pred_check_branch
        %214 = sbr.rel (%p212) target = $region16
      $region15: #{tpu_custom_call.1} parent=11 // pred_region
        _
      $region16: #{tpu_custom_call.1} parent=11 // pred_fallthru
        _
      // Predicated region
      $region17: #{tpu_custom_call.1} parent=11 // pred_check
        %p215 = pneg %p122
      $region18: #{tpu_custom_call.1} parent=11 // pred_check_branch
        %217 = sbr.rel (%p215) target = $region20
      $region19: #{tpu_custom_call.1} parent=11 // pred_region
        _
      $region20: #{tpu_custom_call.1} parent=11 // pred_fallthru
        _
      // Predicated region
      $region21: #{tpu_custom_call.1} parent=11 // pred_check
        %p218 = pneg %p143
      $region22: #{tpu_custom_call.1} parent=11 // pred_check_branch
        %220 = sbr.rel (%p218) target = $region24
      $region23: #{tpu_custom_call.1} parent=11 // pred_region
        _
      $region24: #{tpu_custom_call.1} parent=11 // pred_fallthru
        _
    $region12: #{tpu_custom_call.1} parent=5 // pred_fallthru
      _
    %p221 = scmp.lt.s32.totalorder %s12, 2
    // Predicated region
    $region25: #{tpu_custom_call.1} parent=5 // pred_check
      %p222 = pneg %p221
    $region26: #{tpu_custom_call.1} parent=5 // pred_check_branch
      %224 = sbr.rel (%p222) target = $region28
    $region27: #{tpu_custom_call.1} parent=5 // pred_region
      // Predicated region
      $region29: #{tpu_custom_call.1} parent=27 // pred_check
        %p225 = pneg %p46
      $region30: #{tpu_custom_call.1} parent=27 // pred_check_branch
        %227 = sbr.rel (%p225) target = $region32
      $region31: #{tpu_custom_call.1} parent=27 // pred_region
        %p228 = scmp.lt.s32.totalorder %s19, 1
        %s229 = scalar_select %p228, %s19, 1
        %p230 = scmp.lt.s32.totalorder %s20, 0
        %s231 = scalar_select %p230, %s20, 0
        %s232 = smul.addr %s229, 5
        %s233 = sadd.s32 %s231, %s232
        %s234 = smul.addr %s233, 4
        %s235 = scalar_lea.vmem %s0, %s234
      $region32: #{tpu_custom_call.1} parent=27 // pred_fallthru
        _
      // Predicated region
      $region33: #{tpu_custom_call.1} parent=27 // pred_check
        %p236 = pneg %p74
      $region34: #{tpu_custom_call.1} parent=27 // pred_check_branch
        %238 = sbr.rel (%p236) target = $region36
      $region35: #{tpu_custom_call.1} parent=27 // pred_region
        %p239 = scmp.lt.s32.totalorder %s19, 1
        %s240 = scalar_select %p239, %s19, 1
        %p241 = scmp.lt.s32.totalorder %s20, 0
        %s242 = scalar_select %p241, %s20, 0
        %s243 = smul.addr %s240, 5
        %s244 = sadd.s32 %s242, %s243
        %s245 = smul.addr %s244, 4
        %s246 = scalar_lea.vmem %s1, %s245
      $region36: #{tpu_custom_call.1} parent=27 // pred_fallthru
        _
      // Predicated region
      $region37: #{tpu_custom_call.1} parent=27 // pred_check
        %p247 = pneg %p163
      $region38: #{tpu_custom_call.1} parent=27 // pred_check_branch
        %249 = sbr.rel (%p247) target = $region40
      $region39: #{tpu_custom_call.1} parent=27 // pred_region
        %p250 = scmp.lt.s32.totalorder %s19, 1
        %s251 = scalar_select %p250, %s19, 1
        %s252 = smul.addr %s251, 5
        %s253 = smul.addr %s252, 8
        %s254 = scalar_lea.vmem %s5, %s253
      $region40: #{tpu_custom_call.1} parent=27 // pred_fallthru
        _
    $region28: #{tpu_custom_call.1} parent=5 // pred_fallthru
      _
    %p255 = scmp.le.s32.totalorder 1, %s12
    %p256 = scmp.lt.s32.totalorder %s12, 3
    %p257 = pnand %p255, %p256
    %p258 = pneg %p257
    // Predicated region
    $region41: #{tpu_custom_call.1} parent=5 // pred_check
      _
    $region42: #{tpu_custom_call.1} parent=5 // pred_check_branch
      %260 = sbr.rel (%p257) target = $region44
    $region43: #{tpu_custom_call.1} parent=5 // pred_region
      %s261 = ssub.s32 %s12, 1
      %p262 = scmp.lt.s32.totalorder %s21, 1
      %s263 = scalar_select %p262, %s21, 1
      %p264 = scmp.lt.s32.totalorder %s22, 0
      %s265 = scalar_select %p264, %s22, 0
      %s266 = smul.addr %s263, 5
      %s267 = sadd.s32 %s265, %s266
      %s268 = smul.addr %s267, 4
      %s269 = scalar_lea.vmem %s0, %s268
      %p270 = pneg %p52
      %p271 = pneg %p49
      %p272 = scmp.lt.s32.totalorder %s21, 1
      %s273 = scalar_select %p272, %s21, 1
      %p274 = scmp.lt.s32.totalorder %s22, 0
      %s275 = scalar_select %p274, %s22, 0
      %s276 = smul.addr %s273, 5
      %s277 = sadd.s32 %s275, %s276
      %s278 = smul.addr %s277, 4
      %s279 = scalar_lea.vmem %s1, %s278
      %p280 = pneg %p80
      %p281 = pneg %p77
      %p282 = pneg %p101
      %p283 = pneg %p98
      %p284 = pneg %p122
      %p285 = pneg %p119
      %p286 = pneg %p143
      %p287 = pneg %p140
      %p288 = scmp.lt.s32.totalorder %s21, 1
      %s289 = scalar_select %p288, %s21, 1
      %s290 = smul.addr %s289, 5
      %s291 = smul.addr %s290, 8
      %s292 = scalar_lea.vmem %s5, %s291
      %p293 = pneg %p169
      %p294 = pneg %p166
      %p295 = pneg %p197
      %p296 = pneg %p194
      %p297 = scmp.lt.s32.totalorder %s21, 1
      %s298 = scalar_select %p297, %s21, 1
      %p299 = scmp.lt.s32.totalorder %s22, 0
      %s300 = scalar_select %p299, %s22, 0
      %s301 = smul.addr %s298, 5
      %s302 = sadd.s32 %s300, %s301
      %s303 = smul.addr %s302, 4
      %s304 = scalar_lea.vmem %s6, %s303
      %p305 = scmp.lt.s32.totalorder %s21, 1
      %s306 = scalar_select %p305, %s21, 1
      %p307 = scmp.lt.s32.totalorder %s22, 0
      %s308 = scalar_select %p307, %s22, 0
      %s309 = smul.addr %s306, 5
      %s310 = sadd.s32 %s308, %s309
      %s311 = smul.addr %s310, 4
      %s312 = scalar_lea.vmem %s0, %s311
      %p313 = scmp.lt.s32.totalorder %s21, 1
      %s314 = scalar_select %p313, %s21, 1
      %p315 = scmp.lt.s32.totalorder %s22, 0
      %s316 = scalar_select %p315, %s22, 0
      %s317 = smul.addr %s314, 5
      %s318 = sadd.s32 %s316, %s317
      %s319 = smul.addr %s318, 4
      %s320 = scalar_lea.vmem %s1, %s319
      %p321 = scmp.lt.s32.totalorder %s21, 1
      %s322 = scalar_select %p321, %s21, 1
      %s323 = smul.addr %s322, 5
      %s324 = smul.addr %s323, 8
      %s325 = scalar_lea.vmem %s5, %s324
      %p326 = scmp.lt.s32.totalorder %s21, 1
      %s327 = scalar_select %p326, %s21, 1
      %p328 = scmp.lt.s32.totalorder %s22, 0
      %s329 = scalar_select %p328, %s22, 0
      %s330 = smul.addr %s327, 5
      %s331 = sadd.s32 %s329, %s330
      %s332 = smul.addr %s331, 4
      %s333 = scalar_lea.vmem %s6, %s332
      %v335 = vld [vmem:[%s312] sm:$0xf]
      %v336 = vld [vmem:[%s312 + $0x4] sm:$0xf]
      %v337 = vld [vmem:[%s312 + $0x8] sm:$0xf]
      %v338 = vld [vmem:[%s312 + $0xc] sm:$0xf]
      %v339 = vld [vmem:[%s312 + $0x10] sm:$0x1]
      %v340 = vld [vmem:[%s320] sm:$0xf]
      %v341 = vld [vmem:[%s320 + $0x4] sm:$0xf]
      %v342 = vld [vmem:[%s320 + $0x8] sm:$0xf]
      %v343 = vld [vmem:[%s320 + $0xc] sm:$0xf]
      %v344 = vld [vmem:[%s320 + $0x10] sm:$0x1]
      %v345 = vadd.bf16 %v335, %v340
      %v346 = vadd.bf16 %v336, %v341
      %v347 = vadd.bf16 %v337, %v342
      %v348 = vadd.bf16 %v338, %v343
      %v349 = vadd.bf16 %v339, %v344
      %v350 = vld [vmem:[%s2] sm:$0xf]
      %v351 = vld [vmem:[%s3] sm:$0xff]
      %353 = vset.pattern.permute.xlu0 0
      %354 = vperm.xlu0 %353, %v351
      %v355 = vpop.permute.xlu0 %354
      %v362 = vunpack.c.l.b16 %v345
      %v363 = vunpack.c.l.b16 %v346
      %v364 = vunpack.c.l.b16 %v347
      %v365 = vunpack.c.l.b16 %v348
      %v366 = vunpack.c.l.b16 %v349
      %v367 = vpack.c.b16 %v363, %v362
      %v368 = vpack.c.b16 %v365, %v364
      %v369 = vpack.c.b16 %v366, %v366
      %vm372 = vcmask 269312
      %v374 = vsel %vm372, %v350, 0
      %vm376 = vcmask 1040384
      %v377 = vsel 0, 4294967295, 65535
      %v378 = vsel %vm376, %v377, 0
      %v380 = vand.u32 %v369, %v378
      %382 = vmatprep.subr.bf16.mxu0 0
      %383 = vmatpush1.bf16.msra.mxu0 0
      %384 = vmatprep.subr.bf16.mxu0 0
      %385 = vmatpush1.bf16.msra.mxu0 0
      %386 = vmatprep.subr.bf16.mxu0 0
      %387 = vmatpush1.bf16.msra.mxu0 0
      %388 = vmatprep.subr.bf16.mxu0 0
      %389 = vmatpush1.bf16.msra.mxu0 0
      %390 = vmatprep.subr.bf16.mxu0 0
      %391 = vmatpush1.bf16.msra.mxu0 0
      %392 = vmatprep.subr.bf16.mxu0 0
      %393 = vmatpush1.bf16.msra.mxu0 %v380
      %394 = vmatprep.subr.bf16.mxu0 0
      %395 = vmatpush1.bf16.msra.mxu0 %v368
      %396 = vmatprep.subr.bf16.mxu0 0
      %397 = vmatpush1.bf16.msra.mxu0 %v367
      %398 = vmatprep.subr.bf16.mxu0 0
      %399 = vmatpush2.bf16.msra.mxu0 0
      %400 = vmatprep.subr.bf16.mxu0 0
      %401 = vmatpush2.bf16.msra.mxu0 0
      %402 = vmatprep.subr.bf16.mxu0 0
      %403 = vmatpush2.bf16.msra.mxu0 0
      %404 = vmatprep.subr.bf16.mxu0 0
      %405 = vmatpush2.bf16.msra.mxu0 0
      %406 = vmatprep.subr.bf16.mxu0 0
      %407 = vmatpush2.bf16.msra.mxu0 0
      %408 = vmatprep.subr.bf16.mxu0 0
      %409 = vmatpush2.bf16.msra.mxu0 0
      %410 = vmatprep.subr.bf16.mxu0 0
      %411 = vmatpush2.bf16.msra.mxu0 0
      %412 = vmatprep.subr.bf16.mxu0 0
      %413 = vmatpush2.bf16.msra.mxu0 0
      %414 = vmatprep.mubr.bf16.mxu0 0
      %415 = vmatmul.mubr.bf16.gmra.mxu0 %v374
      %v416 = vpop.f32.mrf.mxu0
      %v417 = vadd.f32 %v355, %v416
      %v418 = vpop.f32.mrf.mxu0
      %v419 = vpop.f32.mrf.mxu0
      %v420 = vpop.f32.mrf.mxu0
      %421 = vdwg.mxu0
      %v422 = vmax.f32 %v417, 0.0
      %v423 = vpack.c.bf16 %v422, %v422
      %v424 = vld [vmem:[%s4] sm:$0xf]
      %v425 = vld [vmem:[%s4 + $0x4] sm:$0xf]
      %v426 = vld [vmem:[%s4 + $0x8] sm:$0xf]
      %v427 = vld [vmem:[%s4 + $0xc] sm:$0xf]
      %v428 = vld [vmem:[%s4 + $0x10] sm:$0x1]
      %v429 = vld [vmem:[%s325] sm:$0xff]
      %v430 = vld [vmem:[%s325 + $0x8] sm:$0xff]
      %v431 = vld [vmem:[%s325 + $0x10] sm:$0xff]
      %v432 = vld [vmem:[%s325 + $0x18] sm:$0xff]
      %v433 = vld [vmem:[%s325 + $0x20] sm:$0x1]
      %435 = vset.pattern.permute.xlu0 0
      %436 = vperm.xlu0 %435, %v429
      %v437 = vpop.permute.xlu0 %436
      %440 = vset.pattern.permute.xlu0 0
      %441 = vperm.xlu0 %440, %v430
      %v442 = vpop.permute.xlu0 %441
      %445 = vset.pattern.permute.xlu0 0
      %446 = vperm.xlu0 %445, %v431
      %v447 = vpop.permute.xlu0 %446
      %450 = vset.pattern.permute.xlu0 0
      %451 = vperm.xlu0 %450, %v432
      %v452 = vpop.permute.xlu0 %451
      %455 = vset.pattern.permute.xlu0 0
      %456 = vperm.xlu0 %455, %v433
      %v457 = vpop.permute.xlu0 %456
      %v464 = vunpack.c.l.b16 %v424
      %v465 = vunpack.c.l.b16 %v425
      %v466 = vunpack.c.l.b16 %v426
      %v467 = vunpack.c.l.b16 %v427
      %v468 = vunpack.c.l.b16 %v428
      %v469 = vpack.c.b16 %v465, %v464
      %v470 = vpack.c.b16 %v467, %v466
      %v471 = vpack.c.b16 %v468, %v468
      %vm472 = vcmask 64512
      %v474 = vsel %vm472, %v469, 0
      %v477 = vsel %vm472, %v470, 0
      %v480 = vsel %vm472, %v471, 0
      %vm482 = vcmask 1043456
      %v484 = vsel %vm482, %v423, 0
      %486 = vmatprep.subr.bf16.mxu0 0
      %487 = vmatpush1.bf16.msra.mxu0 0
      %488 = vmatprep.subr.bf16.mxu0 0
      %489 = vmatpush1.bf16.msra.mxu0 0
      %490 = vmatprep.subr.bf16.mxu0 0
      %491 = vmatpush1.bf16.msra.mxu0 0
      %492 = vmatprep.subr.bf16.mxu0 0
      %493 = vmatpush1.bf16.msra.mxu0 0
      %494 = vmatprep.subr.bf16.mxu0 0
      %495 = vmatpush1.bf16.msra.mxu0 0
      %496 = vmatprep.subr.bf16.mxu0 0
      %497 = vmatpush1.bf16.msra.mxu0 0
      %498 = vmatprep.subr.bf16.mxu0 0
      %499 = vmatpush1.bf16.msra.mxu0 0
      %500 = vmatprep.subr.bf16.mxu0 0
      %501 = vmatpush1.bf16.msra.mxu0 %v484
      %502 = vmatprep.subr.bf16.mxu0 0
      %503 = vmatpush2.bf16.msra.mxu0 0
      %504 = vmatprep.subr.bf16.mxu0 0
      %505 = vmatpush2.bf16.msra.mxu0 0
      %506 = vmatprep.subr.bf16.mxu0 0
      %507 = vmatpush2.bf16.msra.mxu0 0
      %508 = vmatprep.subr.bf16.mxu0 0
      %509 = vmatpush2.bf16.msra.mxu0 0
      %510 = vmatprep.subr.bf16.mxu0 0
      %511 = vmatpush2.bf16.msra.mxu0 0
      %512 = vmatprep.subr.bf16.mxu0 0
      %513 = vmatpush2.bf16.msra.mxu0 0
      %514 = vmatprep.subr.bf16.mxu0 0
      %515 = vmatpush2.bf16.msra.mxu0 0
      %516 = vmatprep.subr.bf16.mxu0 0
      %517 = vmatpush2.bf16.msra.mxu0 0
      %518 = vmatprep.mubr.bf16.mxu0 0
      %519 = vmatmul.mubr.bf16.gmra.mxu0 %v474
      %v520 = vpop.f32.mrf.mxu0
      %v521 = vadd.f32 %v437, %v520
      %v522 = vpop.f32.mrf.mxu0
      %v523 = vpop.f32.mrf.mxu0
      %v524 = vadd.f32 %v442, %v523
      %v525 = vpop.f32.mrf.mxu0
      %526 = vmatprep.mubr.bf16.mxu0 0
      %527 = vmatmul.mubr.bf16.gmra.mxu0 %v477
      %v528 = vpop.f32.mrf.mxu0
      %v529 = vadd.f32 %v447, %v528
      %v530 = vpop.f32.mrf.mxu0
      %v531 = vpop.f32.mrf.mxu0
      %v532 = vadd.f32 %v452, %v531
      %v533 = vpop.f32.mrf.mxu0
      %534 = vmatprep.mubr.bf16.mxu0 0
      %535 = vmatmul.mubr.bf16.gmra.mxu0 %v480
      %v536 = vpop.f32.mrf.mxu0
      %v537 = vadd.f32 %v457, %v536
      %v538 = vpop.f32.mrf.mxu0
      %v539 = vpop.f32.mrf.mxu0
      %v540 = vpop.f32.mrf.mxu0
      %541 = vdwg.mxu0
      %v542 = vxor.u32 %v521, 2147483648
      %v543 = vxor.u32 %v524, 2147483648
      %v544 = vxor.u32 %v529, 2147483648
      %v545 = vxor.u32 %v532, 2147483648
      %v546 = vxor.u32 %v537, 2147483648
      %v547 = vmul.f32 %v542, 1.442695
      %v548 = vpow.pop %v547
      %v549 = vmul.f32 %v543, 1.442695
      %v550 = vpow.pop %v549
      %v551 = vmul.f32 %v544, 1.442695
      %v552 = vpow.pop %v551
      %v553 = vmul.f32 %v545, 1.442695
      %v554 = vpow.pop %v553
      %v555 = vmul.f32 %v546, 1.442695
      %v556 = vpow.pop %v555
      %v557 = vadd.f32 %v548, 1.0
      %v558 = vadd.f32 %v550, 1.0
      %v559 = vadd.f32 %v552, 1.0
      %v560 = vadd.f32 %v554, 1.0
      %v561 = vadd.f32 %v556, 1.0
      %v562 = vrcp.pop %v557
      %v563 = vmul.f32 1.0, %v562
      %v564 = vrcp.pop %v558
      %v565 = vmul.f32 1.0, %v564
      %v566 = vrcp.pop %v559
      %v567 = vmul.f32 1.0, %v566
      %v568 = vrcp.pop %v560
      %v569 = vmul.f32 1.0, %v568
      %v570 = vrcp.pop %v561
      %v571 = vmul.f32 1.0, %v570
      %v572 = vunpack.c.l.bf16 %v335
      %v573 = vunpack.c.l.bf16 %v336
      %v574 = vunpack.c.l.bf16 %v337
      %v575 = vunpack.c.l.bf16 %v338
      %v576 = vunpack.c.l.bf16 %v339
      %v577 = vunpack.c.l.bf16 %v340
      %v578 = vunpack.c.l.bf16 %v341
      %v579 = vunpack.c.l.bf16 %v342
      %v580 = vunpack.c.l.bf16 %v343
      %v581 = vunpack.c.l.bf16 %v344
      %v582 = vsub.f32 %v572, %v577
      %v583 = vsub.f32 %v573, %v578
      %v584 = vsub.f32 %v574, %v579
      %v585 = vsub.f32 %v575, %v580
      %v586 = vsub.f32 %v576, %v581
      %v587 = vmul.f32 %v563, %v582
      %v588 = vmul.f32 %v565, %v583
      %v589 = vmul.f32 %v567, %v584
      %v590 = vmul.f32 %v569, %v585
      %v591 = vmul.f32 %v571, %v586
      %v592 = vadd.f32 %v577, %v587
      %v593 = vadd.f32 %v578, %v588
      %v594 = vadd.f32 %v579, %v589
      %v595 = vadd.f32 %v580, %v590
      %v596 = vadd.f32 %v581, %v591
      %v597 = vpack.c.bf16 %v593, %v592
      %v598 = vpack.c.bf16 %v595, %v594
      %v599 = vpack.c.bf16 %v596, %v596
      %v603 = vunpack.c.l.b16 %v597
      %v604 = vunpack.c.h.b16 %v597
      %v605 = vunpack.c.l.b16 %v598
      %v606 = vunpack.c.h.b16 %v598
      %v607 = vunpack.c.l.b16 %v599
      %v608 = vpack.c.b16 %v603, %v603
      %v609 = vpack.c.b16 %v604, %v604
      %v610 = vpack.c.b16 %v605, %v605
      %v611 = vpack.c.b16 %v606, %v606
      %v612 = vpack.c.b16 %v607, %v607
      %vm618 = vcmask 519168
      %619 = vst.msk [vmem:[%s333] sm:$0xf] %vm618, %v608
      %620 = vst.msk [vmem:[%s333 + $0x4] sm:$0xf] %vm618, %v609
      %621 = vst.msk [vmem:[%s333 + $0x8] sm:$0xf] %vm618, %v610
      %622 = vst.msk [vmem:[%s333 + $0xc] sm:$0xf] %vm618, %v611
      %vm623 = vcmask 516096
      %vm624 = vsmask.f32 256
      %vm625 = vmand %vm623, %vm624
      %v626 = vld [vmem:[%s333 + $0x10] sm:$0x1]
      %v627 = vsel %vm625, %v612, %v626
      %628 = vst [vmem:[%s333 + $0x10] sm:$0x1] %v627
      %p629 = scmp.lt.s32.totalorder %s21, 1
      %s630 = scalar_select %p629, %s21, 1
      %p631 = scmp.lt.s32.totalorder %s22, 0
      %s632 = scalar_select %p631, %s22, 0
      %s633 = smul.addr %s630, 5
      %s634 = sadd.s32 %s632, %s633
      %s635 = smul.addr %s634, 4
      %s636 = scalar_lea.vmem %s6, %s635
      // Predicated region
      $region45: #{tpu_custom_call.1} parent=43 // pred_check
        %p637 = pneg %p194
      $region46: #{tpu_custom_call.1} parent=43 // pred_check_branch
        %639 = sbr.rel (%p637) target = $region48
      $region47: #{tpu_custom_call.1} parent=43 // pred_region
        _
      $region48: #{tpu_custom_call.1} parent=43 // pred_fallthru
        _
    $region44: #{tpu_custom_call.1} parent=5 // pred_fallthru
      _
    %p640 = scmp.le.s32.totalorder 2, %s12
    // Predicated region
    $region49: #{tpu_custom_call.1} parent=5 // pred_check
      %p641 = pneg %p640
    $region50: #{tpu_custom_call.1} parent=5 // pred_check_branch
      %643 = sbr.rel (%p641) target = $region52
    $region51: #{tpu_custom_call.1} parent=5 // pred_region
      %s644 = ssub.s32 %s12, 2
      // Predicated region
      $region53: #{tpu_custom_call.1} parent=51 // pred_check
        %p645 = pneg %p200
      $region54: #{tpu_custom_call.1} parent=51 // pred_check_branch
        %647 = sbr.rel (%p645) target = $region56
      $region55: #{tpu_custom_call.1} parent=51 // pred_region
        %p648 = scmp.lt.s32.totalorder %s23, 1
        %s649 = scalar_select %p648, %s23, 1
        %p650 = scmp.lt.s32.totalorder %s24, 0
        %s651 = scalar_select %p650, %s24, 0
        %s652 = smul.addr %s649, 5
        %s653 = sadd.s32 %s651, %s652
        %s654 = smul.addr %s653, 4
        %s655 = scalar_lea.vmem %s6, %s654
      $region56: #{tpu_custom_call.1} parent=51 // pred_fallthru
        _
    $region52: #{tpu_custom_call.1} parent=5 // pred_fallthru
      _
  $region6: #{tpu_custom_call.1} parent=0 // loop_footer
    %s16 = sadd.s32 1, %s12
  $region7: #{tpu_custom_call.1} parent=0 // loop_footer_branch
    %11 = sbr.rel target = $region3
  $region8: #{tpu_custom_call.1} parent=0 // loop_exit
    _

</llo_original>
